<compile_context>
chip_gen: v5e
topology: v5e:2x2
jax: 0.10.0
libtpu: 0.0.40
codegen_flags: <defaults>
</compile_context>

<pallas_src>
import functools

import jax
import jax.numpy as jnp
from jax.experimental import pallas as pl
from jax.experimental.pallas import tpu as pltpu


# ----------------------------- hardware helpers -----------------------------------
def _tensorcores_per_chip():
    """v7x has 2 TensorCores per chip; v5e/v6e have 1."""
    try:
        kind = jax.devices()[0].device_kind.lower()
    except Exception:
        return 1
    return 2 if ("v7" in kind or "tpu7" in kind) else 1


def _pick_batch_block(batch):
    # Only split the batch across cores on 2-TC chips (v7x). On single-TC chips
    # the "parallel" grid axis is a serial loop, so splitting just halves the
    # MXU LHS rows per vmatmul and doubles grid-step overhead.
    if _tensorcores_per_chip() >= 2 and batch >= 16 and batch % 2 == 0:
        return batch // 2
    return batch


def _vmem_limit_bytes(tt, bc, H, itemsize):
    pre_b = tt * bc * H * itemsize * 2   # double-buffered input stream
    hid_b = tt * bc * H * itemsize * 2   # double-buffered output stream
    whh_b = H * H * itemsize             # single-buffered (grid-invariant)
    h0_b = bc * H * itemsize             # single-buffered (grid-invariant)
    scr_b = bc * H * 4                   # f32 recurrent carry scratch
    needed = pre_b + hid_b + whh_b + h0_b + scr_b
    # v7x has 64 MiB physical VMEM per TC, v5e/v6e have 128 MiB.
    cap = (48 << 20) if _tensorcores_per_chip() >= 2 else (96 << 20)
    return int(max(min(needed + (8 << 20), cap), needed + (1 << 20)))


# ----------------------------- Pallas kernel -------------------------------------
def _make_recurrence_kernel(tt, interleave):
    """Build the recurrence kernel for a static time-block size `tt`.

    Refs (time-major):
      pre_ref : (tt, bc, H)  pre-activations  x @ W_ih^T + b_ih + b_hh
      h0_ref  : (bc, H)      initial hidden state (f32)
      whh_ref : (H, H)       W_hh^T in the compute dtype
      hid_ref : (tt, bc, H)  output hidden states
      h_scr   : (bc, H) f32  recurrent carry, persists across time blocks
    """

    def kernel(pre_ref, h0_ref, whh_ref, hid_ref, h_scr):
        t = pl.program_id(1)

        @pl.when(t == 0)
        def _():
            h_scr[...] = h0_ref[...].astype(jnp.float32)

        whh = whh_ref[...]                 # (H, H), compute dtype (bf16 or f32)
        cdt = whh.dtype
        out_dt = hid_ref.dtype

        if interleave:
            # Two independent batch sub-chains: issue both matmuls back to back
            # so the MXU stays busy while the other chunk's result pops / tanh
            # runs on the EUP.
            half = h_scr.shape[0] // 2
            ha = h_scr[:half, :]
            hb = h_scr[half:, :]
            # TODO(synk): if bundle dumps show vreg spills at large bc*H,
            # switch this unrolled Python loop to lax.fori_loop(unroll=True).
            for i in range(tt):
                pre_i = pre_ref[i].astype(jnp.float32)      # dense (bc, H) slab
                za = jnp.dot(ha.astype(cdt), whh, preferred_element_type=jnp.float32)
                zb = jnp.dot(hb.astype(cdt), whh, preferred_element_type=jnp.float32)
                ha = jnp.tanh(pre_i[:half] + za)
                hb = jnp.tanh(pre_i[half:] + zb)
                hid_ref[i] = jnp.concatenate([ha, hb], axis=0).astype(out_dt)
            h_scr[:half, :] = ha
            h_scr[half:, :] = hb
        else:
            h = h_scr[...]
            for i in range(tt):
                pre_i = pre_ref[i].astype(jnp.float32)      # dense (bc, H) slab
                z = jnp.dot(h.astype(cdt), whh, preferred_element_type=jnp.float32)
                h = jnp.tanh(pre_i + z)
                hid_ref[i] = h.astype(out_dt)
            h_scr[...] = h

    return kernel


def rnn_recurrence_pallas(pre, h0, whh_t, *, tt, bc):
    """pre: (Tp, B, H) time-major pre-activations, Tp % tt == 0.
    h0: (B, H) f32. whh_t: (H, H) = W_hh^T in the compute dtype.
    Returns hidden states (Tp, B, H) in pre.dtype."""
    Tp, B, H = pre.shape
    assert Tp % tt == 0 and B % bc == 0
    interleave = (bc % 16 == 0)          # two sublane-aligned batch sub-chains
    itemsize = pre.dtype.itemsize

    grid_spec = pltpu.PrefetchScalarGridSpec(
        num_scalar_prefetch=0,
        grid=(B // bc, Tp // tt),
        in_specs=[
            # time-major activation stream: dense (bc, H) per-step slabs
            pl.BlockSpec((tt, bc, H), lambda b, t: (t, b, 0)),
            # grid-(time)-invariant inputs: single-buffered to save VMEM
            pl.BlockSpec((bc, H), lambda b, t: (b, 0),
                         pipeline_mode=pl.Buffered(1)),
            pl.BlockSpec((H, H), lambda b, t: (0, 0),
                         pipeline_mode=pl.Buffered(1)),
        ],
        out_specs=pl.BlockSpec((tt, bc, H), lambda b, t: (t, b, 0)),
        scratch_shapes=[pltpu.VMEM((bc, H), jnp.float32)],
    )

    return pl.pallas_call(
        _make_recurrence_kernel(tt, interleave),
        out_shape=jax.ShapeDtypeStruct((Tp, B, H), pre.dtype),
        grid_spec=grid_spec,
        compiler_params=pltpu.CompilerParams(
            # batch blocks are independent recurrences; time is a true recurrence
            # (h_scr carry relies on the time axis being the innermost, serial axis).
            dimension_semantics=("parallel", "arbitrary"),
            vmem_limit_bytes=_vmem_limit_bytes(tt, bc, H, itemsize),
        ),
    )(pre, h0, whh_t)


# ----------------------------- Model wrapper -------------------------------------
def init_params(key, vocab_size, embed_dim, hidden_dim):
    """Deterministic parameter init, same math as the PyTorch module.
    W_hh and W_fc are stored pre-transposed (h @ w_hh_t, h @ w_fc_t) so no
    per-forward transpose kernel appears in the XLA graph."""
    ks = jax.random.split(key, 7)
    s = 1.0 / jnp.sqrt(hidden_dim)
    u = lambda k, shape: jax.random.uniform(k, shape, jnp.float32, -s, s)
    return {
        "embedding": jax.random.normal(ks[0], (vocab_size, embed_dim), jnp.float32),
        "w_ih": u(ks[1], (hidden_dim, embed_dim)),     # PyTorch layout (H, E)
        "w_hh_t": u(ks[2], (hidden_dim, hidden_dim)),  # W_hh^T, used as h @ w_hh_t
        "b_ih": u(ks[3], (hidden_dim,)),
        "b_hh": u(ks[4], (hidden_dim,)),
        "w_fc_t": u(ks[5], (hidden_dim, vocab_size)),  # W_fc^T, used as h @ w_fc_t
        "b_fc": u(ks[6], (vocab_size,)),
    }


_TT_MAX = 16   # timesteps per sequential grid step (amortizes pipeline overhead)


def _round_up(x, m):
    return ((x + m - 1) // m) * m


@functools.partial(jax.jit, static_argnames=("compute_dtype",))
def rnn_language_model_forward(tokens, params, hidden=None, *,
                               compute_dtype=jnp.bfloat16):
    """
    tokens: (B, T) int32
    hidden: optional (1, B, H) f32 (PyTorch nn.RNN hidden layout, num_layers=1)
    returns: logits (B, T, V) f32, hidden (1, B, H) f32
    """
    B, T = tokens.shape
    H = params["w_hh_t"].shape[0]

    # Embedding gather (data-dependent gather; done in XLA glue).
    emb = jnp.take(params["embedding"], tokens, axis=0)                 # (B, T, E)

    # Hoisted input projection as one batched MXU matmul, emitted TIME-MAJOR so
    # the kernel's per-timestep loads are dense (bc, H) slabs.
    # TODO(synk): on v5e, if profiling shows the recurrence is HBM-bound, fuse
    # this projection into the kernel (stream emb blocks, keep W_ih in VMEM) to
    # eliminate the pre (T,B,H) HBM round trip.
    bias = (params["b_ih"] + params["b_hh"]).astype(jnp.float32)
    pre = jnp.einsum("bte,he->tbh", emb.astype(jnp.float32),
                     params["w_ih"]) + bias                             # (T, B, H)

    h0 = (jnp.zeros((B, H), jnp.float32) if hidden is None
          else hidden[0].astype(jnp.float32))

    # Pick the time block and pad T up to a multiple of it (pad steps are
    # sliced off below; the discarded tail costs only wasted compute).
    tt = min(_TT_MAX, _round_up(T, 8))
    t_pad = _round_up(T, tt)
    if t_pad != T:
        pre = jnp.pad(pre, ((0, t_pad - T), (0, 0), (0, 0)))

    bc = _pick_batch_block(B)

    # Sequential recurrence (the only part that cannot be batched over time):
    #   h_t = tanh(pre_t + h_{t-1} @ W_hh^T)
    # bf16 streams/matmul operands by default, f32 accumulation/tanh/carry.
    hid = rnn_recurrence_pallas(pre.astype(compute_dtype), h0,
                                params["w_hh_t"].astype(compute_dtype),
                                tt=tt, bc=bc)                           # (t_pad, B, H)
    hid = hid[:T].astype(jnp.float32)                                   # (T, B, H)

    # Hoisted output projection: one batched (T*B, H) x (H, V) matmul on the MXU.
    # TODO(synk): for production, pick H as a multiple of 256 and bc >= 128 so
    # the per-step (bc,H)x(H,H) matmul fills the 256x256 MXU.
    logits = jnp.einsum("tbh,hv->btv", hid, params["w_fc_t"]) + params["b_fc"]
    h_final = hid[T - 1]                                                # (B, H)
    return logits, h_final[None]                                        # hidden: (1, B, H)


# Pure-JAX reference for correctness checks.
def _reference_forward(tokens, params, hidden=None):
    emb = jnp.take(params["embedding"], tokens, axis=0)                 # (B, T, E)
    B, T, E = emb.shape
    H = params["w_hh_t"].shape[0]
    h0 = jnp.zeros((B, H), jnp.float32) if hidden is None else hidden[0]

    def step(h, x_t):
        h_new = jnp.tanh(x_t @ params["w_ih"].T + params["b_ih"]
                         + h @ params["w_hh_t"] + params["b_hh"])
        return h_new, h_new

    h_final, outs = jax.lax.scan(step, h0, jnp.transpose(emb, (1, 0, 2)))
    output = jnp.transpose(outs, (1, 0, 2))                             # (B, T, H)
    logits = output @ params["w_fc_t"] + params["b_fc"]
    return logits, h_final[None]


# TODO(synk): generate()/prompt() (tokenizer-driven autoregressive sampling)
# are host-side Python control flow; they would call this forward with T=1 and
# the returned hidden state, so they are not part of the kernel.

if __name__ == "__main__":
    vocab_size, embed_dim, hidden_dim = 128, 32, 64
    B, T = 2, 8

    key = jax.random.PRNGKey(0)
    pkey, tkey, pkey2, tkey2 = jax.random.split(key, 4)
    params = init_params(pkey, vocab_size, embed_dim, hidden_dim)
    tokens = jax.random.randint(tkey, (B, T), 0, vocab_size, dtype=jnp.int32)

    # --- exact-precision path (f32 streams + f32 matmul operands) -------------
    logits, hidden = rnn_language_model_forward(tokens, params,
                                                compute_dtype=jnp.float32)
    jax.block_until_ready((logits, hidden))
    ref_logits, ref_hidden = _reference_forward(tokens, params)
    assert logits.shape == (B, T, vocab_size)
    assert hidden.shape == (1, B, hidden_dim)
    assert jnp.allclose(logits, ref_logits, atol=1e-4, rtol=1e-4)
    assert jnp.allclose(hidden, ref_hidden, atol=1e-4, rtol=1e-4)

    # Explicit-hidden path (used by autoregressive generation).
    logits2, hidden2 = rnn_language_model_forward(tokens, params, hidden,
                                                  compute_dtype=jnp.float32)
    jax.block_until_ready((logits2, hidden2))
    ref_logits2, ref_hidden2 = _reference_forward(tokens, params, ref_hidden)
    assert jnp.allclose(logits2, ref_logits2, atol=1e-4, rtol=1e-4)
    assert jnp.allclose(hidden2, ref_hidden2, atol=1e-4, rtol=1e-4)

    # --- default performance path (bf16 streams / matmul operands, f32 carry) -
    # bf16 drift is bounded (tanh is contractive); the tight check is above.
    logits_bf, hidden_bf = rnn_language_model_forward(tokens, params)
    jax.block_until_ready((logits_bf, hidden_bf))
    assert jnp.allclose(logits_bf, ref_logits, atol=7.5e-2, rtol=7.5e-2)
    assert jnp.allclose(hidden_bf, ref_hidden, atol=7.5e-2, rtol=7.5e-2)

    # --- larger shape: multiple time blocks (carry across grid steps), tail
    #     padding (T % tt != 0) and interleaved batch sub-chains (bc % 16 == 0).
    B2, T2, H2 = 16, 44, 128
    params2 = init_params(pkey2, vocab_size, embed_dim, H2)
    tokens2 = jax.random.randint(tkey2, (B2, T2), 0, vocab_size, dtype=jnp.int32)
    logits3, hidden3 = rnn_language_model_forward(tokens2, params2)
    jax.block_until_ready((logits3, hidden3))
    ref_logits3, ref_hidden3 = _reference_forward(tokens2, params2)
    assert logits3.shape == (B2, T2, vocab_size)
    assert hidden3.shape == (1, B2, H2)
    assert jnp.allclose(logits3, ref_logits3, atol=7.5e-2, rtol=7.5e-2)
    assert jnp.allclose(hidden3, ref_hidden3, atol=7.5e-2, rtol=7.5e-2)

    print("KERNEL_OK")
</pallas_src>

<mosaic_0001>
module attributes {stable_mosaic.version = 11 : i64} {
  func.func @kernel(%arg0: i32, %arg1: i32, %arg2: memref<8x2x64xf32, #tpu.memory_space<vmem>>, %arg3: memref<2x64xf32, #tpu.memory_space<vmem>>, %arg4: memref<64x64xf32, #tpu.memory_space<vmem>>, %arg5: memref<8x2x64xf32, #tpu.memory_space<vmem>>, %arg6: memref<2x64xf32, #tpu.memory_space<vmem>>) attributes {dimension_semantics = [#tpu.dimension_semantics<parallel>, #tpu.dimension_semantics<arbitrary>], iteration_bounds = array<i64: 1, 1>, scalar_prefetch = 0 : i64, scratch_operands = 1 : i64, tpu.core_type = #tpu.core_type<tc>, window_params = [{transform_indices = @transform_0, window_bounds = array<i64: 8, 2, 64>}, {pipeline_mode = #tpu.pipeline_mode<synchronous>, transform_indices = @transform_1, window_bounds = array<i64: 2, 64>}, {pipeline_mode = #tpu.pipeline_mode<synchronous>, transform_indices = @transform_2, window_bounds = array<i64: 64, 64>}, {transform_indices = @transform_3, window_bounds = array<i64: 8, 2, 64>}]} {
    %c0_i32 = arith.constant 0 : i32
    %0 = arith.cmpi eq, %arg1, %c0_i32 : i32
    %1 = arith.extui %0 : i1 to i32
    %c0_i32_0 = arith.constant 0 : i32
    %2 = arith.cmpi ne, %1, %c0_i32_0 : i32
    scf.if %2 {
      %c0_54 = arith.constant 0 : index
      %c0_55 = arith.constant 0 : index
      %70 = vector.load %arg3[%c0_54, %c0_55] : memref<2x64xf32, #tpu.memory_space<vmem>>, vector<2x64xf32>
      %c0_56 = arith.constant 0 : index
      %c0_57 = arith.constant 0 : index
      %71 = vector.load %arg6[%c0_56, %c0_57] : memref<2x64xf32, #tpu.memory_space<vmem>>, vector<2x64xf32>
      tpu.vector_store %arg6[%c0_56, %c0_57], %70 {strides = array<i32>} : memref<2x64xf32, #tpu.memory_space<vmem>>, vector<2x64xf32>,
    } else {
    }
    %c0 = arith.constant 0 : index
    %c0_1 = arith.constant 0 : index
    %3 = vector.load %arg4[%c0, %c0_1] : memref<64x64xf32, #tpu.memory_space<vmem>>, vector<64x64xf32>
    %c0_2 = arith.constant 0 : index
    %c0_3 = arith.constant 0 : index
    %4 = vector.load %arg6[%c0_2, %c0_3] : memref<2x64xf32, #tpu.memory_space<vmem>>, vector<2x64xf32>
    %c0_4 = arith.constant 0 : index
    %c0_5 = arith.constant 0 : index
    %c0_6 = arith.constant 0 : index
    %5 = vector.load %arg2[%c0_4, %c0_5, %c0_6] : memref<8x2x64xf32, #tpu.memory_space<vmem>>, vector<1x2x64xf32>
    %6 = vector.shape_cast %5 : vector<1x2x64xf32> to vector<2x64xf32>
    %cst = arith.constant dense<0.000000e+00> : vector<2x64xf32>
    %7 = tpu.matmul %4, %3, %cst {dimension_numbers = #tpu.dot_dimension_numbers<[1], [0], [0], [1], [0, 0, 1, 1], [], []>} : vector<2x64xf32>, vector<64x64xf32>, vector<2x64xf32> -> vector<2x64xf32>
    %8 = arith.addf %6, %7 : vector<2x64xf32>
    %9 = math.tanh %8 : vector<2x64xf32>
    %c0_7 = arith.constant 0 : index
    %c0_8 = arith.constant 0 : index
    %c0_9 = arith.constant 0 : index
    %10 = vector.load %arg5[%c0_7, %c0_8, %c0_9] : memref<8x2x64xf32, #tpu.memory_space<vmem>>, vector<1x2x64xf32>
    %11 = vector.shape_cast %10 : vector<1x2x64xf32> to vector<2x64xf32>
    %12 = vector.shape_cast %9 : vector<2x64xf32> to vector<1x2x64xf32>
    tpu.vector_store %arg5[%c0_7, %c0_8, %c0_9], %12 {strides = array<i32>} : memref<8x2x64xf32, #tpu.memory_space<vmem>>, vector<1x2x64xf32>,
    %c1 = arith.constant 1 : index
    %c0_10 = arith.constant 0 : index
    %c0_11 = arith.constant 0 : index
    %13 = vector.load %arg2[%c1, %c0_10, %c0_11] : memref<8x2x64xf32, #tpu.memory_space<vmem>>, vector<1x2x64xf32>
    %14 = vector.shape_cast %13 : vector<1x2x64xf32> to vector<2x64xf32>
    %cst_12 = arith.constant dense<0.000000e+00> : vector<2x64xf32>
    %15 = tpu.matmul %9, %3, %cst_12 {dimension_numbers = #tpu.dot_dimension_numbers<[1], [0], [0], [1], [0, 0, 1, 1], [], []>} : vector<2x64xf32>, vector<64x64xf32>, vector<2x64xf32> -> vector<2x64xf32>
    %16 = arith.addf %14, %15 : vector<2x64xf32>
    %17 = math.tanh %16 : vector<2x64xf32>
    %c1_13 = arith.constant 1 : index
    %c0_14 = arith.constant 0 : index
    %c0_15 = arith.constant 0 : index
    %18 = vector.load %arg5[%c1_13, %c0_14, %c0_15] : memref<8x2x64xf32, #tpu.memory_space<vmem>>, vector<1x2x64xf32>
    %19 = vector.shape_cast %18 : vector<1x2x64xf32> to vector<2x64xf32>
    %20 = vector.shape_cast %17 : vector<2x64xf32> to vector<1x2x64xf32>
    tpu.vector_store %arg5[%c1_13, %c0_14, %c0_15], %20 {strides = array<i32>} : memref<8x2x64xf32, #tpu.memory_space<vmem>>, vector<1x2x64xf32>,
    %c2 = arith.constant 2 : index
    %c0_16 = arith.constant 0 : index
    %c0_17 = arith.constant 0 : index
    %21 = vector.load %arg2[%c2, %c0_16, %c0_17] : memref<8x2x64xf32, #tpu.memory_space<vmem>>, vector<1x2x64xf32>
    %22 = vector.shape_cast %21 : vector<1x2x64xf32> to vector<2x64xf32>
    %cst_18 = arith.constant dense<0.000000e+00> : vector<2x64xf32>
    %23 = tpu.matmul %17, %3, %cst_18 {dimension_numbers = #tpu.dot_dimension_numbers<[1], [0], [0], [1], [0, 0, 1, 1], [], []>} : vector<2x64xf32>, vector<64x64xf32>, vector<2x64xf32> -> vector<2x64xf32>
    %24 = arith.addf %22, %23 : vector<2x64xf32>
    %25 = math.tanh %24 : vector<2x64xf32>
    %c2_19 = arith.constant 2 : index
    %c0_20 = arith.constant 0 : index
    %c0_21 = arith.constant 0 : index
    %26 = vector.load %arg5[%c2_19, %c0_20, %c0_21] : memref<8x2x64xf32, #tpu.memory_space<vmem>>, vector<1x2x64xf32>
    %27 = vector.shape_cast %26 : vector<1x2x64xf32> to vector<2x64xf32>
    %28 = vector.shape_cast %25 : vector<2x64xf32> to vector<1x2x64xf32>
    tpu.vector_store %arg5[%c2_19, %c0_20, %c0_21], %28 {strides = array<i32>} : memref<8x2x64xf32, #tpu.memory_space<vmem>>, vector<1x2x64xf32>,
    %c3 = arith.constant 3 : index
    %c0_22 = arith.constant 0 : index
    %c0_23 = arith.constant 0 : index
    %29 = vector.load %arg2[%c3, %c0_22, %c0_23] : memref<8x2x64xf32, #tpu.memory_space<vmem>>, vector<1x2x64xf32>
    %30 = vector.shape_cast %29 : vector<1x2x64xf32> to vector<2x64xf32>
    %cst_24 = arith.constant dense<0.000000e+00> : vector<2x64xf32>
    %31 = tpu.matmul %25, %3, %cst_24 {dimension_numbers = #tpu.dot_dimension_numbers<[1], [0], [0], [1], [0, 0, 1, 1], [], []>} : vector<2x64xf32>, vector<64x64xf32>, vector<2x64xf32> -> vector<2x64xf32>
    %32 = arith.addf %30, %31 : vector<2x64xf32>
    %33 = math.tanh %32 : vector<2x64xf32>
    %c3_25 = arith.constant 3 : index
    %c0_26 = arith.constant 0 : index
    %c0_27 = arith.constant 0 : index
    %34 = vector.load %arg5[%c3_25, %c0_26, %c0_27] : memref<8x2x64xf32, #tpu.memory_space<vmem>>, vector<1x2x64xf32>
    %35 = vector.shape_cast %34 : vector<1x2x64xf32> to vector<2x64xf32>
    %36 = vector.shape_cast %33 : vector<2x64xf32> to vector<1x2x64xf32>
    tpu.vector_store %arg5[%c3_25, %c0_26, %c0_27], %36 {strides = array<i32>} : memref<8x2x64xf32, #tpu.memory_space<vmem>>, vector<1x2x64xf32>,
    %c4 = arith.constant 4 : index
    %c0_28 = arith.constant 0 : index
    %c0_29 = arith.constant 0 : index
    %37 = vector.load %arg2[%c4, %c0_28, %c0_29] : memref<8x2x64xf32, #tpu.memory_space<vmem>>, vector<1x2x64xf32>
    %38 = vector.shape_cast %37 : vector<1x2x64xf32> to vector<2x64xf32>
    %cst_30 = arith.constant dense<0.000000e+00> : vector<2x64xf32>
    %39 = tpu.matmul %33, %3, %cst_30 {dimension_numbers = #tpu.dot_dimension_numbers<[1], [0], [0], [1], [0, 0, 1, 1], [], []>} : vector<2x64xf32>, vector<64x64xf32>, vector<2x64xf32> -> vector<2x64xf32>
    %40 = arith.addf %38, %39 : vector<2x64xf32>
    %41 = math.tanh %40 : vector<2x64xf32>
    %c4_31 = arith.constant 4 : index
    %c0_32 = arith.constant 0 : index
    %c0_33 = arith.constant 0 : index
    %42 = vector.load %arg5[%c4_31, %c0_32, %c0_33] : memref<8x2x64xf32, #tpu.memory_space<vmem>>, vector<1x2x64xf32>
    %43 = vector.shape_cast %42 : vector<1x2x64xf32> to vector<2x64xf32>
    %44 = vector.shape_cast %41 : vector<2x64xf32> to vector<1x2x64xf32>
    tpu.vector_store %arg5[%c4_31, %c0_32, %c0_33], %44 {strides = array<i32>} : memref<8x2x64xf32, #tpu.memory_space<vmem>>, vector<1x2x64xf32>,
    %c5 = arith.constant 5 : index
    %c0_34 = arith.constant 0 : index
    %c0_35 = arith.constant 0 : index
    %45 = vector.load %arg2[%c5, %c0_34, %c0_35] : memref<8x2x64xf32, #tpu.memory_space<vmem>>, vector<1x2x64xf32>
    %46 = vector.shape_cast %45 : vector<1x2x64xf32> to vector<2x64xf32>
    %cst_36 = arith.constant dense<0.000000e+00> : vector<2x64xf32>
    %47 = tpu.matmul %41, %3, %cst_36 {dimension_numbers = #tpu.dot_dimension_numbers<[1], [0], [0], [1], [0, 0, 1, 1], [], []>} : vector<2x64xf32>, vector<64x64xf32>, vector<2x64xf32> -> vector<2x64xf32>
    %48 = arith.addf %46, %47 : vector<2x64xf32>
    %49 = math.tanh %48 : vector<2x64xf32>
    %c5_37 = arith.constant 5 : index
    %c0_38 = arith.constant 0 : index
    %c0_39 = arith.constant 0 : index
    %50 = vector.load %arg5[%c5_37, %c0_38, %c0_39] : memref<8x2x64xf32, #tpu.memory_space<vmem>>, vector<1x2x64xf32>
    %51 = vector.shape_cast %50 : vector<1x2x64xf32> to vector<2x64xf32>
    %52 = vector.shape_cast %49 : vector<2x64xf32> to vector<1x2x64xf32>
    tpu.vector_store %arg5[%c5_37, %c0_38, %c0_39], %52 {strides = array<i32>} : memref<8x2x64xf32, #tpu.memory_space<vmem>>, vector<1x2x64xf32>,
    %c6 = arith.constant 6 : index
    %c0_40 = arith.constant 0 : index
    %c0_41 = arith.constant 0 : index
    %53 = vector.load %arg2[%c6, %c0_40, %c0_41] : memref<8x2x64xf32, #tpu.memory_space<vmem>>, vector<1x2x64xf32>
    %54 = vector.shape_cast %53 : vector<1x2x64xf32> to vector<2x64xf32>
    %cst_42 = arith.constant dense<0.000000e+00> : vector<2x64xf32>
    %55 = tpu.matmul %49, %3, %cst_42 {dimension_numbers = #tpu.dot_dimension_numbers<[1], [0], [0], [1], [0, 0, 1, 1], [], []>} : vector<2x64xf32>, vector<64x64xf32>, vector<2x64xf32> -> vector<2x64xf32>
    %56 = arith.addf %54, %55 : vector<2x64xf32>
    %57 = math.tanh %56 : vector<2x64xf32>
    %c6_43 = arith.constant 6 : index
    %c0_44 = arith.constant 0 : index
    %c0_45 = arith.constant 0 : index
    %58 = vector.load %arg5[%c6_43, %c0_44, %c0_45] : memref<8x2x64xf32, #tpu.memory_space<vmem>>, vector<1x2x64xf32>
    %59 = vector.shape_cast %58 : vector<1x2x64xf32> to vector<2x64xf32>
    %60 = vector.shape_cast %57 : vector<2x64xf32> to vector<1x2x64xf32>
    tpu.vector_store %arg5[%c6_43, %c0_44, %c0_45], %60 {strides = array<i32>} : memref<8x2x64xf32, #tpu.memory_space<vmem>>, vector<1x2x64xf32>,
    %c7 = arith.constant 7 : index
    %c0_46 = arith.constant 0 : index
    %c0_47 = arith.constant 0 : index
    %61 = vector.load %arg2[%c7, %c0_46, %c0_47] : memref<8x2x64xf32, #tpu.memory_space<vmem>>, vector<1x2x64xf32>
    %62 = vector.shape_cast %61 : vector<1x2x64xf32> to vector<2x64xf32>
    %cst_48 = arith.constant dense<0.000000e+00> : vector<2x64xf32>
    %63 = tpu.matmul %57, %3, %cst_48 {dimension_numbers = #tpu.dot_dimension_numbers<[1], [0], [0], [1], [0, 0, 1, 1], [], []>} : vector<2x64xf32>, vector<64x64xf32>, vector<2x64xf32> -> vector<2x64xf32>
    %64 = arith.addf %62, %63 : vector<2x64xf32>
    %65 = math.tanh %64 : vector<2x64xf32>
    %c7_49 = arith.constant 7 : index
    %c0_50 = arith.constant 0 : index
    %c0_51 = arith.constant 0 : index
    %66 = vector.load %arg5[%c7_49, %c0_50, %c0_51] : memref<8x2x64xf32, #tpu.memory_space<vmem>>, vector<1x2x64xf32>
    %67 = vector.shape_cast %66 : vector<1x2x64xf32> to vector<2x64xf32>
    %68 = vector.shape_cast %65 : vector<2x64xf32> to vector<1x2x64xf32>
    tpu.vector_store %arg5[%c7_49, %c0_50, %c0_51], %68 {strides = array<i32>} : memref<8x2x64xf32, #tpu.memory_space<vmem>>, vector<1x2x64xf32>,
    %c0_52 = arith.constant 0 : index
    %c0_53 = arith.constant 0 : index
    %69 = vector.load %arg6[%c0_52, %c0_53] : memref<2x64xf32, #tpu.memory_space<vmem>>, vector<2x64xf32>
    tpu.vector_store %arg6[%c0_52, %c0_53], %65 {strides = array<i32>} : memref<2x64xf32, #tpu.memory_space<vmem>>, vector<2x64xf32>,
    return
  }
  func.func @transform_0(%arg0: i32, %arg1: i32) -> (i32, i32, i32) {
    %c0_i32 = arith.constant 0 : i32
    %c0_i32_0 = arith.constant 0 : i32
    return %arg1, %arg0, %c0_i32 : i32, i32, i32
  }
  func.func @transform_1(%arg0: i32, %arg1: i32) -> (i32, i32) {
    %c0_i32 = arith.constant 0 : i32
    %c0_i32_0 = arith.constant 0 : i32
    return %arg0, %c0_i32 : i32, i32
  }
  func.func @transform_2(%arg0: i32, %arg1: i32) -> (i32, i32) {
    %c0_i32 = arith.constant 0 : i32
    %c0_i32_0 = arith.constant 0 : i32
    %c0_i32_1 = arith.constant 0 : i32
    return %c0_i32, %c0_i32_0 : i32, i32
  }
  func.func @transform_3(%arg0: i32, %arg1: i32) -> (i32, i32, i32) {
    %c0_i32 = arith.constant 0 : i32
    %c0_i32_0 = arith.constant 0 : i32
    return %arg1, %arg0, %c0_i32 : i32, i32, i32
  }
}

</mosaic_0001>

<llo_original>
// kernel: rnn_language_model_forward.1
$region0: #{rnn_language_model_forward.1}
  #allocation0 [shape = 'u32[]', space=smem, size = 0x4, offset = 0x4, fixed_abs, tag = 'smem constant byte address 0x4 - core index']
  #allocation1 [shape = 'u32[72,128]{1,0:T(1,128)}', space=vmem, size = 0x9000, scoped, tag = 'internal scratch']
  #allocation2 [shape = 'f32[2,64]{1,0:T(2,128)}', space=vmem, size = 0x400, scoped, tag = 'scratch operand']
  %s0 = inlined_call_operand.vmem [shape: f32[8,2,64], index: 0, kind: input, shape index: {}]
  %s1 = inlined_call_operand.vmem [shape: f32[2,64], index: 1, kind: input, shape index: {}]
  %s2 = inlined_call_operand.vmem [shape: f32[64,64], index: 2, kind: input, shape index: {}]
  %s3 = inlined_call_operand.vmem [shape: f32[8,2,64], index: 3, kind: output, shape index: {}]
  %s4 = sld [smem:[#allocation0]]
  $region26: #{rnn_language_model_forward.1} parent=0
    _
  %s6 = ssub.s32 1, %s4
  %s7 = scalar_select 0, %s6, %s4
  // Predicated region
  $region2: #{rnn_language_model_forward.1} parent=0 // pred_check
    _
  $region3: #{rnn_language_model_forward.1} parent=0 // pred_check_branch
    %9 = sbr.rel (0) target = $region5
  $region4: #{rnn_language_model_forward.1} parent=0 // pred_region
    _
  $region5: #{rnn_language_model_forward.1} parent=0 // pred_fallthru
    _
  // Predicated region
  $region6: #{rnn_language_model_forward.1} parent=0 // pred_check
    _
  $region7: #{rnn_language_model_forward.1} parent=0 // pred_check_branch
    %11 = sbr.rel (0) target = $region9
  $region8: #{rnn_language_model_forward.1} parent=0 // pred_region
    _
  $region9: #{rnn_language_model_forward.1} parent=0 // pred_fallthru
    _
  // Predicated region
  $region10: #{rnn_language_model_forward.1} parent=0 // pred_check
    _
  $region11: #{rnn_language_model_forward.1} parent=0 // pred_check_branch
    %13 = sbr.rel (0) target = $region13
  $region12: #{rnn_language_model_forward.1} parent=0 // pred_region
    _
  $region13: #{rnn_language_model_forward.1} parent=0 // pred_fallthru
    _
  %p14 = scmp.eq.s32.totalorder 0, 0
  // Predicated region
  $region14: #{rnn_language_model_forward.1} parent=0 // pred_check
    %p15 = pneg %p14
  $region15: #{rnn_language_model_forward.1} parent=0 // pred_check_branch
    %17 = sbr.rel (%p15) target = $region17
  $region16: #{rnn_language_model_forward.1} parent=0 // pred_region
    %v18 = vld [vmem:[%s1] sm:$0x3]
    %vm19 = vcmask 517120
    %20 = vst.msk [vmem:[#allocation2] sm:$0x3] %vm19, %v18
  $region17: #{rnn_language_model_forward.1} parent=0 // pred_fallthru
    _
  %v21 = vld [vmem:[%s2] sm:$0xff]
  %v22 = vld [vmem:[%s2 + $0x8] sm:$0xff]
  %v23 = vld [vmem:[%s2 + $0x10] sm:$0xff]
  %v24 = vld [vmem:[%s2 + $0x18] sm:$0xff]
  %v25 = vld [vmem:[%s2 + $0x20] sm:$0xff]
  %v26 = vld [vmem:[%s2 + $0x28] sm:$0xff]
  %v27 = vld [vmem:[%s2 + $0x30] sm:$0xff]
  %v28 = vld [vmem:[%s2 + $0x38] sm:$0xff]
  %v29 = vld [vmem:[#allocation2] sm:$0x3]
  %v30 = vld [vmem:[%s0] sm:$0x3]
  %vm31 = vcmask 523264
  %v33 = vsel %vm31, %v29, 0
  %35 = vmatpush.msra.mxu0 0.0
  %36 = vmatpush.msra.mxu0 0.0
  %37 = vmatpush.msra.mxu0 0.0
  %38 = vmatpush.msra.mxu0 0.0
  %39 = vmatpush.msra.mxu0 0.0
  %40 = vmatpush.msra.mxu0 0.0
  %41 = vmatpush.msra.mxu0 0.0
  %42 = vmatpush.msra.mxu0 0.0
  %43 = vmatpush.msra.mxu0 %v28
  %44 = vmatpush.msra.mxu0 %v27
  %45 = vmatpush.msra.mxu0 %v26
  %46 = vmatpush.msra.mxu0 %v25
  %47 = vmatpush.msra.mxu0 %v24
  %48 = vmatpush.msra.mxu0 %v23
  %49 = vmatpush.msra.mxu0 %v22
  %50 = vmatpush.msra.mxu0 %v21
  %51 = vmatmul.f32.gmra.mxu0 %v33
  %v52 = vpop.f32.mrf.mxu0
  %v53 = vadd.f32 0.0, %v52
  %54 = vdwg.mxu0
  %v55 = vadd.f32 %v30, %v53
  %v56 = vtanh.pop %v55
  %vm57 = vcmask 517120
  %58 = vst.msk [vmem:[%s3] sm:$0x3] %vm57, %v56
  %s59 = scalar_lea.vmem %s0, 2
  %v60 = vld [vmem:[%s59] sm:$0x3]
  %v62 = vsel %vm31, %v56, 0
  %64 = vmatpush.msra.mxu0 0.0
  %65 = vmatpush.msra.mxu0 0.0
  %66 = vmatpush.msra.mxu0 0.0
  %67 = vmatpush.msra.mxu0 0.0
  %68 = vmatpush.msra.mxu0 0.0
  %69 = vmatpush.msra.mxu0 0.0
  %70 = vmatpush.msra.mxu0 0.0
  %71 = vmatpush.msra.mxu0 0.0
  %72 = vmatpush.msra.mxu0 %v28
  %73 = vmatpush.msra.mxu0 %v27
  %74 = vmatpush.msra.mxu0 %v26
  %75 = vmatpush.msra.mxu0 %v25
  %76 = vmatpush.msra.mxu0 %v24
  %77 = vmatpush.msra.mxu0 %v23
  %78 = vmatpush.msra.mxu0 %v22
  %79 = vmatpush.msra.mxu0 %v21
  %80 = vmatmul.f32.gmra.mxu0 %v62
  %v81 = vpop.f32.mrf.mxu0
  %v82 = vadd.f32 0.0, %v81
  %83 = vdwg.mxu0
  %v84 = vadd.f32 %v60, %v82
  %v85 = vtanh.pop %v84
  %s86 = scalar_lea.vmem %s3, 2
  %87 = vst.msk [vmem:[%s86] sm:$0x3] %vm57, %v85
  %s88 = scalar_lea.vmem %s0, 4
  %v89 = vld [vmem:[%s88] sm:$0x3]
  %v91 = vsel %vm31, %v85, 0
  %93 = vmatpush.msra.mxu0 0.0
  %94 = vmatpush.msra.mxu0 0.0
  %95 = vmatpush.msra.mxu0 0.0
  %96 = vmatpush.msra.mxu0 0.0
  %97 = vmatpush.msra.mxu0 0.0
  %98 = vmatpush.msra.mxu0 0.0
  %99 = vmatpush.msra.mxu0 0.0
  %100 = vmatpush.msra.mxu0 0.0
  %101 = vmatpush.msra.mxu0 %v28
  %102 = vmatpush.msra.mxu0 %v27
  %103 = vmatpush.msra.mxu0 %v26
  %104 = vmatpush.msra.mxu0 %v25
  %105 = vmatpush.msra.mxu0 %v24
  %106 = vmatpush.msra.mxu0 %v23
  %107 = vmatpush.msra.mxu0 %v22
  %108 = vmatpush.msra.mxu0 %v21
  %109 = vmatmul.f32.gmra.mxu0 %v91
  %v110 = vpop.f32.mrf.mxu0
  %v111 = vadd.f32 0.0, %v110
  %112 = vdwg.mxu0
  %v113 = vadd.f32 %v89, %v111
  %v114 = vtanh.pop %v113
  %s115 = scalar_lea.vmem %s3, 4
  %116 = vst.msk [vmem:[%s115] sm:$0x3] %vm57, %v114
  %s117 = scalar_lea.vmem %s0, 6
  %v118 = vld [vmem:[%s117] sm:$0x3]
  %v120 = vsel %vm31, %v114, 0
  %122 = vmatpush.msra.mxu0 0.0
  %123 = vmatpush.msra.mxu0 0.0
  %124 = vmatpush.msra.mxu0 0.0
  %125 = vmatpush.msra.mxu0 0.0
  %126 = vmatpush.msra.mxu0 0.0
  %127 = vmatpush.msra.mxu0 0.0
  %128 = vmatpush.msra.mxu0 0.0
  %129 = vmatpush.msra.mxu0 0.0
  %130 = vmatpush.msra.mxu0 %v28
  %131 = vmatpush.msra.mxu0 %v27
  %132 = vmatpush.msra.mxu0 %v26
  %133 = vmatpush.msra.mxu0 %v25
  %134 = vmatpush.msra.mxu0 %v24
  %135 = vmatpush.msra.mxu0 %v23
  %136 = vmatpush.msra.mxu0 %v22
  %137 = vmatpush.msra.mxu0 %v21
  %138 = vmatmul.f32.gmra.mxu0 %v120
  %v139 = vpop.f32.mrf.mxu0
  %v140 = vadd.f32 0.0, %v139
  %141 = vdwg.mxu0
  %v142 = vadd.f32 %v118, %v140
  %v143 = vtanh.pop %v142
  %s144 = scalar_lea.vmem %s3, 6
  %145 = vst.msk [vmem:[%s144] sm:$0x3] %vm57, %v143
  %s146 = scalar_lea.vmem %s0, 8
  %v147 = vld [vmem:[%s146] sm:$0x3]
  %v149 = vsel %vm31, %v143, 0
  %151 = vmatpush.msra.mxu0 0.0
  %152 = vmatpush.msra.mxu0 0.0
  %153 = vmatpush.msra.mxu0 0.0
  %154 = vmatpush.msra.mxu0 0.0
  %155 = vmatpush.msra.mxu0 0.0
  %156 = vmatpush.msra.mxu0 0.0
  %157 = vmatpush.msra.mxu0 0.0
  %158 = vmatpush.msra.mxu0 0.0
  %159 = vmatpush.msra.mxu0 %v28
  %160 = vmatpush.msra.mxu0 %v27
  %161 = vmatpush.msra.mxu0 %v26
  %162 = vmatpush.msra.mxu0 %v25
  %163 = vmatpush.msra.mxu0 %v24
  %164 = vmatpush.msra.mxu0 %v23
  %165 = vmatpush.msra.mxu0 %v22
  %166 = vmatpush.msra.mxu0 %v21
  %167 = vmatmul.f32.gmra.mxu0 %v149
  %v168 = vpop.f32.mrf.mxu0
  %v169 = vadd.f32 0.0, %v168
  %170 = vdwg.mxu0
  %v171 = vadd.f32 %v147, %v169
  %v172 = vtanh.pop %v171
  %s173 = scalar_lea.vmem %s3, 8
  %174 = vst.msk [vmem:[%s173] sm:$0x3] %vm57, %v172
  %s175 = scalar_lea.vmem %s0, 10
  %v176 = vld [vmem:[%s175] sm:$0x3]
  %v178 = vsel %vm31, %v172, 0
  %180 = vmatpush.msra.mxu0 0.0
  %181 = vmatpush.msra.mxu0 0.0
  %182 = vmatpush.msra.mxu0 0.0
  %183 = vmatpush.msra.mxu0 0.0
  %184 = vmatpush.msra.mxu0 0.0
  %185 = vmatpush.msra.mxu0 0.0
  %186 = vmatpush.msra.mxu0 0.0
  %187 = vmatpush.msra.mxu0 0.0
  %188 = vmatpush.msra.mxu0 %v28
  %189 = vmatpush.msra.mxu0 %v27
  %190 = vmatpush.msra.mxu0 %v26
  %191 = vmatpush.msra.mxu0 %v25
  %192 = vmatpush.msra.mxu0 %v24
  %193 = vmatpush.msra.mxu0 %v23
  %194 = vmatpush.msra.mxu0 %v22
  %195 = vmatpush.msra.mxu0 %v21
  %196 = vmatmul.f32.gmra.mxu0 %v178
  %v197 = vpop.f32.mrf.mxu0
  %v198 = vadd.f32 0.0, %v197
  %199 = vdwg.mxu0
  %v200 = vadd.f32 %v176, %v198
  %v201 = vtanh.pop %v200
  %s202 = scalar_lea.vmem %s3, 10
  %203 = vst.msk [vmem:[%s202] sm:$0x3] %vm57, %v201
  %s204 = scalar_lea.vmem %s0, 12
  %v205 = vld [vmem:[%s204] sm:$0x3]
  %v207 = vsel %vm31, %v201, 0
  %209 = vmatpush.msra.mxu0 0.0
  %210 = vmatpush.msra.mxu0 0.0
  %211 = vmatpush.msra.mxu0 0.0
  %212 = vmatpush.msra.mxu0 0.0
  %213 = vmatpush.msra.mxu0 0.0
  %214 = vmatpush.msra.mxu0 0.0
  %215 = vmatpush.msra.mxu0 0.0
  %216 = vmatpush.msra.mxu0 0.0
  %217 = vmatpush.msra.mxu0 %v28
  %218 = vmatpush.msra.mxu0 %v27
  %219 = vmatpush.msra.mxu0 %v26
  %220 = vmatpush.msra.mxu0 %v25
  %221 = vmatpush.msra.mxu0 %v24
  %222 = vmatpush.msra.mxu0 %v23
  %223 = vmatpush.msra.mxu0 %v22
  %224 = vmatpush.msra.mxu0 %v21
  %225 = vmatmul.f32.gmra.mxu0 %v207
  %v226 = vpop.f32.mrf.mxu0
  %v227 = vadd.f32 0.0, %v226
  %228 = vdwg.mxu0
  %v229 = vadd.f32 %v205, %v227
  %v230 = vtanh.pop %v229
  %s231 = scalar_lea.vmem %s3, 12
  %232 = vst.msk [vmem:[%s231] sm:$0x3] %vm57, %v230
  %s233 = scalar_lea.vmem %s0, 14
  %v234 = vld [vmem:[%s233] sm:$0x3]
  %v236 = vsel %vm31, %v230, 0
  %238 = vmatpush.msra.mxu0 0.0
  %239 = vmatpush.msra.mxu0 0.0
  %240 = vmatpush.msra.mxu0 0.0
  %241 = vmatpush.msra.mxu0 0.0
  %242 = vmatpush.msra.mxu0 0.0
  %243 = vmatpush.msra.mxu0 0.0
  %244 = vmatpush.msra.mxu0 0.0
  %245 = vmatpush.msra.mxu0 0.0
  %246 = vmatpush.msra.mxu0 %v28
  %247 = vmatpush.msra.mxu0 %v27
  %248 = vmatpush.msra.mxu0 %v26
  %249 = vmatpush.msra.mxu0 %v25
  %250 = vmatpush.msra.mxu0 %v24
  %251 = vmatpush.msra.mxu0 %v23
  %252 = vmatpush.msra.mxu0 %v22
  %253 = vmatpush.msra.mxu0 %v21
  %254 = vmatmul.f32.gmra.mxu0 %v236
  %v255 = vpop.f32.mrf.mxu0
  %v256 = vadd.f32 0.0, %v255
  %257 = vdwg.mxu0
  %v258 = vadd.f32 %v234, %v256
  %v259 = vtanh.pop %v258
  %s260 = scalar_lea.vmem %s3, 14
  %261 = vst.msk [vmem:[%s260] sm:$0x3] %vm57, %v259
  %262 = vst.msk [vmem:[#allocation2] sm:$0x3] %vm57, %v259
  // Predicated region
  $region18: #{rnn_language_model_forward.1} parent=0 // pred_check
    _
  $region19: #{rnn_language_model_forward.1} parent=0 // pred_check_branch
    %264 = sbr.rel (0) target = $region21
  $region20: #{rnn_language_model_forward.1} parent=0 // pred_region
    _
  $region21: #{rnn_language_model_forward.1} parent=0 // pred_fallthru
    _
  // Predicated region
  $region22: #{rnn_language_model_forward.1} parent=0 // pred_check
    _
  $region23: #{rnn_language_model_forward.1} parent=0 // pred_check_branch
    %266 = sbr.rel (0) target = $region25
  $region24: #{rnn_language_model_forward.1} parent=0 // pred_region
    _
  $region25: #{rnn_language_model_forward.1} parent=0 // pred_fallthru
    _

</llo_original>
